<compile_context>
chip_gen: v6e
topology: v6e:2x2x1
jax: 0.10.0
libtpu: 0.0.40
codegen_flags: <defaults>
</compile_context>

<pallas_src>
import functools

import jax
import jax.numpy as jnp
from jax import lax
from jax.experimental import pallas as pl
from jax.experimental.pallas import tpu as pltpu


def _ntxent_kernel(zjs_ref, zis_ref, out_ref, lhs_ref, *, batch_size, row_tile,
                   inv_temperature, use_cosine, matmul_dtype):
    b = batch_size
    tr = row_tile
    inv_t = jnp.float32(inv_temperature)

    def normalize(x):
        x = x.astype(jnp.float32)
        if use_cosine:
            # torch CosineSimilarity eps=1e-8:  x / max(||x||, 1e-8)
            sq = jnp.sum(x * x, axis=-1, keepdims=True)
            x = x * lax.rsqrt(jnp.maximum(sq, 1e-16))
        return x

    # Resident full column set (constant index_map, single-buffered).  The
    # normalization recompute per grid step is the price of keeping the grid
    # axis "parallel"; for realistic TR it hides under the MXU.
    a_all = normalize(zjs_ref[...]).astype(matmul_dtype)   # rows 0..B-1  of [zjs; zis]
    b_all = normalize(zis_ref[...]).astype(matmul_dtype)   # rows B..2B-1

    # This block's query rows (same row offset in both halves).  Re-normalizing
    # the TR-row slice here is O(TR*Dp) — negligible — and avoids an unsupported
    # dynamic slice of a kernel *value* along sublanes.
    rs = pl.multiple_of(pl.program_id(0) * tr, tr)
    a_blk = normalize(zjs_ref[pl.ds(rs, tr), :])            # (TR, Dp) f32
    b_blk = normalize(zis_ref[pl.ds(rs, tr), :])            # (TR, Dp) f32

    # Positive logits in f32: <zjs_i, zis_i> on normalized vectors (O(TR*Dp)).
    pos = jnp.sum(a_blk * b_blk, axis=-1, keepdims=True)    # (TR, 1)

    # Merged LHS: 2*TR query rows in one MXU feed (scratch doubles as cast sink).
    lhs_ref[:tr, :] = a_blk.astype(matmul_dtype)
    lhs_ref[tr:, :] = b_blk.astype(matmul_dtype)
    lhs = lhs_ref[...]                                      # (2*TR, Dp)

    # Contract the LAST dim of both operands (q @ k^T pattern): MXU-native, no
    # transposed RHS copy.  bf16 in, f32 accumulate.
    dn = (((1,), (1,)), ((), ()))
    s_a = lax.dot_general(lhs, a_all, dn, preferred_element_type=jnp.float32)
    s_b = lax.dot_general(lhs, b_all, dn, preferred_element_type=jnp.float32)

    # Temperature applied post-matmul in f32 (one VPU scale on the (2TR,B) blocks).
    s_a = s_a * inv_t
    s_b = s_b * inv_t

    # Exclude self-similarity only (the positive column stays in the logsumexp,
    # exactly matching [positives, negatives] of the reference).
    row = lax.broadcasted_iota(jnp.int32, (2 * tr, b), 0)
    col = lax.broadcasted_iota(jnp.int32, (2 * tr, b), 1)
    neg_inf = jnp.float32(-jnp.inf)
    s_a = jnp.where((row < tr) & (col == row + rs), neg_inf, s_a)
    s_b = jnp.where((row >= tr) & (col == (row - tr) + rs), neg_inf, s_b)

    # Row-wise logsumexp over all 2B columns (split across the two halves).
    m = jnp.maximum(jnp.max(s_a, axis=-1, keepdims=True),
                    jnp.max(s_b, axis=-1, keepdims=True))
    lse = m + jnp.log(jnp.sum(jnp.exp(s_a - m), axis=-1, keepdims=True)
                      + jnp.sum(jnp.exp(s_b - m), axis=-1, keepdims=True))

    # Partial loss for this row block: each positive is shared by the matching
    # rows of both halves.  Broadcast to a lane-dense (8,128) tile for the store.
    partial = (jnp.sum(lse, keepdims=True)
               - 2.0 * inv_t * jnp.sum(pos, keepdims=True))           # (1, 1)
    out_ref[...] = jnp.broadcast_to(partial, (8, 128))


def _estimate_vmem_bytes(b, dp, tr, in_itemsize, mm_itemsize):
    resident = 2 * b * dp * in_itemsize             # 2 resident inputs, Buffered(1)
    prep = 2 * b * dp * (4 + mm_itemsize)           # f32 normalized + matmul-dtype cols
    blocks = 2 * tr * dp * 4                        # f32 block slices
    lhs = 2 * tr * dp * mm_itemsize                 # merged-LHS scratch
    sim = 4 * (2 * tr) * b * 4                      # ~4 live (2TR, B) f32 temporaries
    out = 2 * 8 * 128 * 4                           # pipelined output tile
    return resident + prep + blocks + lhs + sim + out + (2 << 20)


def _vmem_budget_bytes():
    # ~75% of physical VMEM per generation (v5e/v6e 128 MiB -> 96 MiB, v7x
    # 64 MiB -> 48 MiB); conservative 48 MiB fallback if the query is unavailable.
    try:
        cap = int(pltpu.get_tpu_info().vmem_capacity_bytes)
        return max((cap * 3) // 4, 32 << 20)
    except Exception:
        return 48 << 20


def _pick_row_tile(b, dp, in_itemsize, mm_itemsize, budget, max_tile=256):
    """Largest divisor of b (<= max_tile) whose working set fits the VMEM budget,
    preferring MXU-friendly multiples (2*TR = 256 / 128 / 16 rows)."""
    divisors = [t for t in range(1, min(b, max_tile) + 1) if b % t == 0]
    fitting = [t for t in divisors
               if _estimate_vmem_bytes(b, dp, t, in_itemsize, mm_itemsize) <= budget]
    cands = fitting if fitting else divisors[:1]     # smallest divisor if none fits
    return max(cands, key=lambda t: (t % 128 == 0, t % 64 == 0, t % 8 == 0, t))


def _resident_spec(shape):
    # Constant index_map -> nothing to double-buffer; Buffered(1) halves the
    # resident-input VMEM footprint.  Fall back if pipeline_mode is unavailable.
    try:
        return pl.BlockSpec(shape, lambda i: (0, 0), pipeline_mode=pl.Buffered(1))
    except (TypeError, AttributeError):
        return pl.BlockSpec(shape, lambda i: (0, 0))


def ntxent_loss(zis, zjs, *, batch_size, temperature, use_cosine_similarity=True,
                matmul_dtype=jnp.bfloat16, row_tile=None):
    assert zis.shape == zjs.shape and zis.shape[0] == batch_size
    b, d = zis.shape

    # Zero-pad the feature dim to a 128-lane multiple (changes neither dot
    # products nor norms) so vector ops / the MXU contraction run unmasked.
    dp = ((d + 127) // 128) * 128
    if dp != d:
        pad = ((0, 0), (0, dp - d))
        zis = jnp.pad(zis, pad)
        zjs = jnp.pad(zjs, pad)

    in_itemsize = jnp.dtype(zis.dtype).itemsize
    mm_itemsize = jnp.dtype(matmul_dtype).itemsize
    budget = _vmem_budget_bytes()

    tr = row_tile if row_tile is not None else _pick_row_tile(
        b, dp, in_itemsize, mm_itemsize, budget)
    assert b % tr == 0, "row tile must divide the batch size"
    nb = b // tr

    est = _estimate_vmem_bytes(b, dp, tr, in_itemsize, mm_itemsize)
    if est <= budget:
        vmem_limit = max(est, 32 << 20)              # never below the default scope
    else:
        # Even the smallest row tile exceeds the generation budget: request the
        # true working set instead of silently clamping (fails loudly, not subtly).
        vmem_limit = est

    kernel = functools.partial(
        _ntxent_kernel,
        batch_size=b,
        row_tile=tr,
        inv_temperature=1.0 / float(temperature),
        use_cosine=bool(use_cosine_similarity),
        matmul_dtype=matmul_dtype,
    )

    out = pl.pallas_call(
        kernel,
        out_shape=jax.ShapeDtypeStruct((nb * 8, 128), jnp.float32),
        grid_spec=pltpu.PrefetchScalarGridSpec(
            num_scalar_prefetch=0,
            grid=(nb,),
            in_specs=[
                _resident_spec((b, dp)),             # zjs: resident columns
                _resident_spec((b, dp)),             # zis: resident columns
            ],
            out_specs=pl.BlockSpec((8, 128), lambda i: (i, 0)),
            scratch_shapes=[pltpu.VMEM((2 * tr, dp), matmul_dtype)],
        ),
        compiler_params=pltpu.CompilerParams(
            dimension_semantics=("parallel",),       # independent row blocks (v7x: 2 TCs)
            vmem_limit_bytes=int(vmem_limit),
        ),
    )(zjs, zis)

    partials = out.reshape(nb, 8, 128)[:, 0, 0]      # one scalar per row block
    return jnp.sum(partials) / jnp.float32(2 * b)


def _reference(zis, zjs, *, batch_size, temperature, use_cosine_similarity=True):
    # Plain-JAX reference mirroring the PyTorch forward, for a sanity check.
    rep = jnp.concatenate([zjs, zis], axis=0).astype(jnp.float32)
    if use_cosine_similarity:
        n = jnp.maximum(jnp.linalg.norm(rep, axis=-1, keepdims=True), 1e-8)
        rn = rep / n
        sim = rn @ rn.T
    else:
        sim = rep @ rep.T
    n2 = 2 * batch_size
    l_pos = jnp.diagonal(sim, offset=batch_size)
    r_pos = jnp.diagonal(sim, offset=-batch_size)
    positives = jnp.concatenate([l_pos, r_pos]).reshape(n2, 1)
    eye = jnp.eye(n2, dtype=bool)
    up = jnp.eye(n2, k=batch_size, dtype=bool)
    dn = jnp.eye(n2, k=-batch_size, dtype=bool)
    keep = ~(eye | up | dn)
    negatives = sim[keep].reshape(n2, n2 - 2)
    logits = jnp.concatenate([positives, negatives], axis=1) / temperature
    logp = jax.nn.log_softmax(logits, axis=-1)
    return -jnp.sum(logp[:, 0]) / n2


if __name__ == "__main__":
    temperature = 0.5
    key = jax.random.PRNGKey(0)
    k1, k2, k3, k4 = jax.random.split(key, 4)

    # Case 1: single grid step, exact f32 MXU path, both similarity modes.
    b1, d1 = 4, 32
    zis1 = jax.random.normal(k1, (b1, d1), dtype=jnp.float32)
    zjs1 = jax.random.normal(k2, (b1, d1), dtype=jnp.float32)
    for use_cos in (True, False):
        got = jax.block_until_ready(ntxent_loss(
            zis1, zjs1, batch_size=b1, temperature=temperature,
            use_cosine_similarity=use_cos, matmul_dtype=jnp.float32))
        ref = _reference(zis1, zjs1, batch_size=b1, temperature=temperature,
                         use_cosine_similarity=use_cos)
        assert jnp.allclose(got, ref, rtol=1e-4, atol=1e-4), (use_cos, got, ref)

    # Case 2: multi-step grid (nb = 2), bf16 MXU fast path.
    b2, d2 = 16, 96
    zis2 = jax.random.normal(k3, (b2, d2), dtype=jnp.float32)
    zjs2 = jax.random.normal(k4, (b2, d2), dtype=jnp.float32)
    got2 = jax.block_until_ready(ntxent_loss(
        zis2, zjs2, batch_size=b2, temperature=temperature,
        use_cosine_similarity=True, row_tile=8))
    ref2 = _reference(zis2, zjs2, batch_size=b2, temperature=temperature,
                      use_cosine_similarity=True)
    assert jnp.allclose(got2, ref2, rtol=3e-2, atol=3e-2), (got2, ref2)

    # Case 3: bf16 inputs through the bf16 MXU path (multi-step grid).
    zis3 = zis2.astype(jnp.bfloat16)
    zjs3 = zjs2.astype(jnp.bfloat16)
    got3 = jax.block_until_ready(ntxent_loss(
        zis3, zjs3, batch_size=b2, temperature=temperature,
        use_cosine_similarity=True, row_tile=8))
    ref3 = _reference(zis3.astype(jnp.float32), zjs3.astype(jnp.float32),
                      batch_size=b2, temperature=temperature,
                      use_cosine_similarity=True)
    assert jnp.allclose(got3, ref3, rtol=3e-2, atol=3e-2), (got3, ref3)

    print("KERNEL_OK")
</pallas_src>

<mosaic_0001>
module attributes {stable_mosaic.version = 11 : i64} {
  func.func @_ntxent_kernel(%arg0: i32, %arg1: memref<4x128xf32, #tpu.memory_space<vmem>>, %arg2: memref<4x128xf32, #tpu.memory_space<vmem>>, %arg3: memref<8x128xf32, #tpu.memory_space<vmem>>, %arg4: memref<8x128xf32, #tpu.memory_space<vmem>>) attributes {dimension_semantics = [#tpu.dimension_semantics<parallel>], iteration_bounds = array<i64: 1>, scalar_prefetch = 0 : i64, scratch_operands = 1 : i64, tpu.core_type = #tpu.core_type<tc>, window_params = [{pipeline_mode = #tpu.pipeline_mode<synchronous>, transform_indices = @transform_0, window_bounds = array<i64: 4, 128>}, {pipeline_mode = #tpu.pipeline_mode<synchronous>, transform_indices = @transform_1, window_bounds = array<i64: 4, 128>}, {transform_indices = @transform_2, window_bounds = array<i64: 8, 128>}]} {
    %c0 = arith.constant 0 : index
    %c0_0 = arith.constant 0 : index
    %0 = vector.load %arg1[%c0, %c0_0] : memref<4x128xf32, #tpu.memory_space<vmem>>, vector<4x128xf32>
    %1 = arith.mulf %0, %0 : vector<4x128xf32>
    %cst = arith.constant dense<0.000000e+00> : vector<4xf32>
    %2 = vector.multi_reduction <add>, %1, %cst [1] : vector<4x128xf32> to vector<4xf32>
    %3 = vector.shape_cast %2 : vector<4xf32> to vector<4x1xf32>
    %cst_1 = arith.constant 1.000000e-16 : f32
    %4 = vector.broadcast %cst_1 : f32 to vector<4x1xf32>
    %5 = arith.maximumf %3, %4 : vector<4x1xf32>
    %6 = math.rsqrt %5 : vector<4x1xf32>
    %7 = vector.broadcast %6 : vector<4x1xf32> to vector<4x128xf32>
    %8 = arith.mulf %0, %7 : vector<4x128xf32>
    %c0_2 = arith.constant 0 : index
    %c0_3 = arith.constant 0 : index
    %9 = vector.load %arg2[%c0_2, %c0_3] : memref<4x128xf32, #tpu.memory_space<vmem>>, vector<4x128xf32>
    %10 = arith.mulf %9, %9 : vector<4x128xf32>
    %cst_4 = arith.constant dense<0.000000e+00> : vector<4xf32>
    %11 = vector.multi_reduction <add>, %10, %cst_4 [1] : vector<4x128xf32> to vector<4xf32>
    %12 = vector.shape_cast %11 : vector<4xf32> to vector<4x1xf32>
    %cst_5 = arith.constant 1.000000e-16 : f32
    %13 = vector.broadcast %cst_5 : f32 to vector<4x1xf32>
    %14 = arith.maximumf %12, %13 : vector<4x1xf32>
    %15 = math.rsqrt %14 : vector<4x1xf32>
    %16 = vector.broadcast %15 : vector<4x1xf32> to vector<4x128xf32>
    %17 = arith.mulf %9, %16 : vector<4x128xf32>
    %c4_i32 = arith.constant 4 : i32
    %18 = arith.muli %arg0, %c4_i32 : i32
    %19 = tpu.assume_multiple %18, 4 : i32
    %20 = arith.index_cast %19 : i32 to index
    %c0_6 = arith.constant 0 : index
    %21 = vector.load %arg1[%20, %c0_6] : memref<4x128xf32, #tpu.memory_space<vmem>>, vector<4x128xf32>
    %22 = arith.mulf %21, %21 : vector<4x128xf32>
    %cst_7 = arith.constant dense<0.000000e+00> : vector<4xf32>
    %23 = vector.multi_reduction <add>, %22, %cst_7 [1] : vector<4x128xf32> to vector<4xf32>
    %24 = vector.shape_cast %23 : vector<4xf32> to vector<4x1xf32>
    %cst_8 = arith.constant 1.000000e-16 : f32
    %25 = vector.broadcast %cst_8 : f32 to vector<4x1xf32>
    %26 = arith.maximumf %24, %25 : vector<4x1xf32>
    %27 = math.rsqrt %26 : vector<4x1xf32>
    %28 = vector.broadcast %27 : vector<4x1xf32> to vector<4x128xf32>
    %29 = arith.mulf %21, %28 : vector<4x128xf32>
    %30 = arith.index_cast %19 : i32 to index
    %c0_9 = arith.constant 0 : index
    %31 = vector.load %arg2[%30, %c0_9] : memref<4x128xf32, #tpu.memory_space<vmem>>, vector<4x128xf32>
    %32 = arith.mulf %31, %31 : vector<4x128xf32>
    %cst_10 = arith.constant dense<0.000000e+00> : vector<4xf32>
    %33 = vector.multi_reduction <add>, %32, %cst_10 [1] : vector<4x128xf32> to vector<4xf32>
    %34 = vector.shape_cast %33 : vector<4xf32> to vector<4x1xf32>
    %cst_11 = arith.constant 1.000000e-16 : f32
    %35 = vector.broadcast %cst_11 : f32 to vector<4x1xf32>
    %36 = arith.maximumf %34, %35 : vector<4x1xf32>
    %37 = math.rsqrt %36 : vector<4x1xf32>
    %38 = vector.broadcast %37 : vector<4x1xf32> to vector<4x128xf32>
    %39 = arith.mulf %31, %38 : vector<4x128xf32>
    %40 = arith.mulf %29, %39 : vector<4x128xf32>
    %cst_12 = arith.constant dense<0.000000e+00> : vector<4xf32>
    %41 = vector.multi_reduction <add>, %40, %cst_12 [1] : vector<4x128xf32> to vector<4xf32>
    %42 = vector.shape_cast %41 : vector<4xf32> to vector<4x1xf32>
    %c0_13 = arith.constant 0 : index
    %c0_14 = arith.constant 0 : index
    %43 = vector.load %arg4[%c0_13, %c0_14] : memref<8x128xf32, #tpu.memory_space<vmem>>, vector<4x128xf32>
    tpu.vector_store %arg4[%c0_13, %c0_14], %29 {strides = array<i32>} : memref<8x128xf32, #tpu.memory_space<vmem>>, vector<4x128xf32>,
    %c4 = arith.constant 4 : index
    %c0_15 = arith.constant 0 : index
    %44 = vector.load %arg4[%c4, %c0_15] : memref<8x128xf32, #tpu.memory_space<vmem>>, vector<4x128xf32>
    tpu.vector_store %arg4[%c4, %c0_15], %39 {strides = array<i32>} : memref<8x128xf32, #tpu.memory_space<vmem>>, vector<4x128xf32>,
    %c0_16 = arith.constant 0 : index
    %c0_17 = arith.constant 0 : index
    %45 = vector.load %arg4[%c0_16, %c0_17] : memref<8x128xf32, #tpu.memory_space<vmem>>, vector<8x128xf32>
    %cst_18 = arith.constant dense<0.000000e+00> : vector<8x4xf32>
    %46 = tpu.matmul %45, %8, %cst_18 {dimension_numbers = #tpu.dot_dimension_numbers<[1], [1], [0], [0], [0, 0, 1, 0], [], []>} : vector<8x128xf32>, vector<4x128xf32>, vector<8x4xf32> -> vector<8x4xf32>
    %cst_19 = arith.constant dense<0.000000e+00> : vector<8x4xf32>
    %47 = tpu.matmul %45, %17, %cst_19 {dimension_numbers = #tpu.dot_dimension_numbers<[1], [1], [0], [0], [0, 0, 1, 0], [], []>} : vector<8x128xf32>, vector<4x128xf32>, vector<8x4xf32> -> vector<8x4xf32>
    %cst_20 = arith.constant 2.000000e+00 : f32
    %48 = vector.broadcast %cst_20 : f32 to vector<8x4xf32>
    %49 = arith.mulf %46, %48 : vector<8x4xf32>
    %cst_21 = arith.constant 2.000000e+00 : f32
    %50 = vector.broadcast %cst_21 : f32 to vector<8x4xf32>
    %51 = arith.mulf %47, %50 : vector<8x4xf32>
    %52 = tpu.iota {dimensions = array<i32: 0>} : vector<8x4xi32>
    %53 = tpu.iota {dimensions = array<i32: 1>} : vector<8x4xi32>
    %c4_i32_22 = arith.constant 4 : i32
    %54 = vector.broadcast %c4_i32_22 : i32 to vector<8x4xi32>
    %55 = arith.cmpi slt, %52, %54 : vector<8x4xi32>
    %56 = vector.broadcast %19 : i32 to vector<8x4xi32>
    %57 = arith.addi %52, %56 : vector<8x4xi32>
    %58 = arith.cmpi eq, %53, %57 : vector<8x4xi32>
    %59 = arith.andi %55, %58 : vector<8x4xi1>
    %cst_23 = arith.constant 0xFF800000 : f32
    %60 = vector.broadcast %cst_23 : f32 to vector<8x4xf32>
    %61 = arith.select %59, %60, %49 : vector<8x4xi1>, vector<8x4xf32>
    %c4_i32_24 = arith.constant 4 : i32
    %62 = vector.broadcast %c4_i32_24 : i32 to vector<8x4xi32>
    %63 = arith.cmpi sge, %52, %62 : vector<8x4xi32>
    %c4_i32_25 = arith.constant 4 : i32
    %64 = vector.broadcast %c4_i32_25 : i32 to vector<8x4xi32>
    %65 = arith.subi %52, %64 : vector<8x4xi32>
    %66 = vector.broadcast %19 : i32 to vector<8x4xi32>
    %67 = arith.addi %65, %66 : vector<8x4xi32>
    %68 = arith.cmpi eq, %53, %67 : vector<8x4xi32>
    %69 = arith.andi %63, %68 : vector<8x4xi1>
    %cst_26 = arith.constant 0xFF800000 : f32
    %70 = vector.broadcast %cst_26 : f32 to vector<8x4xf32>
    %71 = arith.select %69, %70, %51 : vector<8x4xi1>, vector<8x4xf32>
    %cst_27 = arith.constant dense<0xFF800000> : vector<8xf32>
    %72 = vector.multi_reduction <maximumf>, %61, %cst_27 [1] : vector<8x4xf32> to vector<8xf32>
    %73 = vector.shape_cast %72 : vector<8xf32> to vector<8x1xf32>
    %cst_28 = arith.constant dense<0xFF800000> : vector<8xf32>
    %74 = vector.multi_reduction <maximumf>, %71, %cst_28 [1] : vector<8x4xf32> to vector<8xf32>
    %75 = vector.shape_cast %74 : vector<8xf32> to vector<8x1xf32>
    %76 = arith.maximumf %73, %75 : vector<8x1xf32>
    %77 = vector.broadcast %76 : vector<8x1xf32> to vector<8x4xf32>
    %78 = arith.subf %61, %77 : vector<8x4xf32>
    %79 = math.exp %78 : vector<8x4xf32>
    %cst_29 = arith.constant dense<0.000000e+00> : vector<8xf32>
    %80 = vector.multi_reduction <add>, %79, %cst_29 [1] : vector<8x4xf32> to vector<8xf32>
    %81 = vector.shape_cast %80 : vector<8xf32> to vector<8x1xf32>
    %82 = vector.broadcast %76 : vector<8x1xf32> to vector<8x4xf32>
    %83 = arith.subf %71, %82 : vector<8x4xf32>
    %84 = math.exp %83 : vector<8x4xf32>
    %cst_30 = arith.constant dense<0.000000e+00> : vector<8xf32>
    %85 = vector.multi_reduction <add>, %84, %cst_30 [1] : vector<8x4xf32> to vector<8xf32>
    %86 = vector.shape_cast %85 : vector<8xf32> to vector<8x1xf32>
    %87 = arith.addf %81, %86 : vector<8x1xf32>
    %88 = math.log %87 : vector<8x1xf32>
    %89 = arith.addf %76, %88 : vector<8x1xf32>
    %90 = vector.shape_cast %89 : vector<8x1xf32> to vector<1x8x1xf32>
    %cst_31 = arith.constant dense<0.000000e+00> : vector<1xf32>
    %91 = vector.multi_reduction <add>, %90, %cst_31 [1, 2] : vector<1x8x1xf32> to vector<1xf32>
    %92 = vector.shape_cast %91 : vector<1xf32> to vector<1x1x1xf32>
    %93 = vector.extract %92[0, 0, 0] : f32 from vector<1x1x1xf32>
    %94 = vector.broadcast %93 : f32 to vector<1x1xf32>
    %cst_32 = arith.constant 2.000000e+00 : f32
    %cst_33 = arith.constant 2.000000e+00 : f32
    %95 = arith.mulf %cst_32, %cst_33 : f32
    %96 = vector.shape_cast %42 : vector<4x1xf32> to vector<1x4x1xf32>
    %cst_34 = arith.constant dense<0.000000e+00> : vector<1xf32>
    %97 = vector.multi_reduction <add>, %96, %cst_34 [1, 2] : vector<1x4x1xf32> to vector<1xf32>
    %98 = vector.shape_cast %97 : vector<1xf32> to vector<1x1x1xf32>
    %99 = vector.extract %98[0, 0, 0] : f32 from vector<1x1x1xf32>
    %100 = vector.broadcast %99 : f32 to vector<1x1xf32>
    %101 = vector.broadcast %95 : f32 to vector<1x1xf32>
    %102 = arith.mulf %101, %100 : vector<1x1xf32>
    %103 = arith.subf %94, %102 : vector<1x1xf32>
    %104 = vector.shape_cast %103 : vector<1x1xf32> to vector<1x1xf32>
    %105 = vector.broadcast %104 : vector<1x1xf32> to vector<8x128xf32>
    %c0_35 = arith.constant 0 : index
    %c0_36 = arith.constant 0 : index
    %106 = vector.load %arg3[%c0_35, %c0_36] : memref<8x128xf32, #tpu.memory_space<vmem>>, vector<8x128xf32>
    tpu.vector_store %arg3[%c0_35, %c0_36], %105 {strides = array<i32>} : memref<8x128xf32, #tpu.memory_space<vmem>>, vector<8x128xf32>,
    return
  }
  func.func @transform_0(%arg0: i32) -> (i32, i32) {
    %c0_i32 = arith.constant 0 : i32
    %c0_i32_0 = arith.constant 0 : i32
    %c0_i32_1 = arith.constant 0 : i32
    return %c0_i32, %c0_i32_0 : i32, i32
  }
  func.func @transform_1(%arg0: i32) -> (i32, i32) {
    %c0_i32 = arith.constant 0 : i32
    %c0_i32_0 = arith.constant 0 : i32
    %c0_i32_1 = arith.constant 0 : i32
    return %c0_i32, %c0_i32_0 : i32, i32
  }
  func.func @transform_2(%arg0: i32) -> (i32, i32) {
    %c0_i32 = arith.constant 0 : i32
    %c0_i32_0 = arith.constant 0 : i32
    return %arg0, %c0_i32 : i32, i32
  }
}

</mosaic_0001>

<llo_original>
// kernel: tpu_custom_call.1
$region0: #{tpu_custom_call.1}
  #allocation0 [shape = 'u32[]', space=smem, size = 0x4, offset = 0x4, fixed_abs, tag = 'smem constant byte address 0x4 - core index']
  #allocation1 [shape = 'u32[144,128]{1,0:T(1,128)}', space=vmem, size = 0x12000, scoped, tag = 'internal scratch']
  #allocation2 [shape = 'f32[8,128]{1,0:T(8,128)}', space=vmem, size = 0x1000, scoped, tag = 'scratch operand']
  %s0 = inlined_call_operand.hbm [shape: f32[4,128], index: 0, kind: input, shape index: {}]
  %s1 = inlined_call_operand.hbm [shape: f32[4,128], index: 1, kind: input, shape index: {}]
  %s2 = inlined_call_operand.hbm [shape: f32[8,128], index: 2, kind: output, shape index: {}]
  %s3 = sld [smem:[#allocation0]]
  $region26: #{tpu_custom_call.1} parent=0
    _
  %s5 = ssub.s32 1, %s3
  %s6 = scalar_select 0, %s5, %s3
  $region1: #{tpu_custom_call.1} parent=0
    #allocation3 [shape = 'u8[2048]{0}', space=vmem, size = 0x800, scoped, tag = 'input window, operand 0, single buffered']
    #allocation4 [shape = 's32[1]{0}', space=sflag, size = 0x4, scoped, tag = 'scoped memory for tpu_custom_call.1']
    #allocation5 [shape = 's32[1]{0}', space=sflag, size = 0x4, scoped, tag = 'scoped memory for tpu_custom_call.1']
    #allocation6 [shape = 'u8[2048]{0}', space=vmem, size = 0x800, scoped, tag = 'input window, operand 1, single buffered']
    #allocation7 [shape = 's32[1]{0}', space=sflag, size = 0x4, scoped, tag = 'scoped memory for tpu_custom_call.1']
    #allocation8 [shape = 'u8[4096]{0}', space=vmem, size = 0x1000, scoped, tag = 'output window, operand 0, single buffered']
    %7 = vsyncpa [#allocation4], 0
    %8 = vsyncpa [#allocation7], 0
    %9 = vsyncpa [#allocation5], 0
    // Predicated region
    $region2: #{tpu_custom_call.1} parent=1 // pred_check
      _
    $region3: #{tpu_custom_call.1} parent=1 // pred_check_branch
      %11 = sbr.rel (0) target = $region5
    $region4: #{tpu_custom_call.1} parent=1 // pred_region
      %s13 = ssub.s32 64, 64
      %14 = vsyncadd [#allocation4], %s13
      %s16 = sshll.u32 [#allocation3], 4
      %s17 = int_to_ptr.vmem [resolvable:$true] %s16
      %19 = dma.hbm_to_vmem [thread:$0]  %s0, 64, %s17, [#allocation4]
    $region5: #{tpu_custom_call.1} parent=1 // pred_fallthru
      _
    // Predicated region
    $region6: #{tpu_custom_call.1} parent=1 // pred_check
      _
    $region7: #{tpu_custom_call.1} parent=1 // pred_check_branch
      %21 = sbr.rel (0) target = $region9
    $region8: #{tpu_custom_call.1} parent=1 // pred_region
      %s23 = ssub.s32 64, 64
      %24 = vsyncadd [#allocation7], %s23
      %s26 = sshll.u32 [#allocation6], 4
      %s27 = int_to_ptr.vmem [resolvable:$true] %s26
      %29 = dma.hbm_to_vmem [thread:$0]  %s1, 64, %s27, [#allocation7]
    $region9: #{tpu_custom_call.1} parent=1 // pred_fallthru
      _
    // Predicated region
    $region10: #{tpu_custom_call.1} parent=1 // pred_check
      _
    $region11: #{tpu_custom_call.1} parent=1 // pred_check_branch
      %31 = sbr.rel (0) target = $region13
    $region12: #{tpu_custom_call.1} parent=1 // pred_region
      %32 = dma.done [#allocation4], 64
    $region13: #{tpu_custom_call.1} parent=1 // pred_fallthru
      _
    // Predicated region
    $region14: #{tpu_custom_call.1} parent=1 // pred_check
      _
    $region15: #{tpu_custom_call.1} parent=1 // pred_check_branch
      %34 = sbr.rel (0) target = $region17
    $region16: #{tpu_custom_call.1} parent=1 // pred_region
      %35 = dma.done [#allocation7], 64
    $region17: #{tpu_custom_call.1} parent=1 // pred_fallthru
      _
    %v36 = vld [vmem:[#allocation3] sm:$0xf]
    %v37 = vmul.f32 %v36, %v36
    %vm38 = vcmask 1043456
    %v39 = vsel %vm38, %v37, 0.0
    %40 = vadd.xlane.f32.xlu0 %v39
    %v41 = vpop.xlane.xlu0 %40
    %v42 = vmax.f32 %v41, 1e-16
    %v43 = vrsqrt.pop %v42
    %v44 = vmul.f32 %v36, %v43
    %v45 = vld [vmem:[#allocation6] sm:$0xf]
    %v46 = vmul.f32 %v45, %v45
    %v47 = vsel %vm38, %v46, 0.0
    %48 = vadd.xlane.f32.xlu0 %v47
    %v49 = vpop.xlane.xlu0 %48
    %v50 = vmax.f32 %v49, 1e-16
    %v51 = vrsqrt.pop %v50
    %v52 = vmul.f32 %v45, %v51
    %s53 = smul.u32 0, 4
    %s54 = scalar_lea.vmem [#allocation3], %s53
    %v55 = vld [vmem:[%s54] sm:$0xf]
    %v56 = vmul.f32 %v55, %v55
    %v57 = vsel %vm38, %v56, 0.0
    %58 = vadd.xlane.f32.xlu0 %v57
    %v59 = vpop.xlane.xlu0 %58
    %v60 = vmax.f32 %v59, 1e-16
    %v61 = vrsqrt.pop %v60
    %v62 = vmul.f32 %v55, %v61
    %s63 = scalar_lea.vmem [#allocation6], %s53
    %v64 = vld [vmem:[%s63] sm:$0xf]
    %v65 = vmul.f32 %v64, %v64
    %v66 = vsel %vm38, %v65, 0.0
    %67 = vadd.xlane.f32.xlu0 %v66
    %v68 = vpop.xlane.xlu0 %67
    %v69 = vmax.f32 %v68, 1e-16
    %v70 = vrsqrt.pop %v69
    %v71 = vmul.f32 %v64, %v70
    %v72 = vmul.f32 %v62, %v71
    %v73 = vsel %vm38, %v72, 0.0
    %74 = vadd.xlane.f32.xlu0 %v73
    %v75 = vpop.xlane.xlu0 %74
    %76 = vst [vmem:[#allocation2] sm:$0xf] %v62
    %77 = vst [vmem:[#allocation2 + $0x4] sm:$0xf] %v71
    %v78 = vld [vmem:[#allocation2] sm:$0xff]
    %79 = vmatprep.subr.mxu0 0.0
    %80 = vmatpush1.xpose.msra.mxu0 0.0
    %81 = vmatprep.subr.mxu0 0.0
    %82 = vmatpush1.xpose.msra.mxu0 0.0
    %83 = vmatprep.subr.mxu0 0.0
    %84 = vmatpush1.xpose.msra.mxu0 0.0
    %85 = vmatprep.subr.mxu0 0.0
    %86 = vmatpush1.xpose.msra.mxu0 0.0
    %87 = vmatprep.subr.mxu0 0.0
    %88 = vmatpush1.xpose.msra.mxu0 0.0
    %89 = vmatprep.subr.mxu0 0.0
    %90 = vmatpush1.xpose.msra.mxu0 0.0
    %91 = vmatprep.subr.mxu0 0.0
    %92 = vmatpush1.xpose.msra.mxu0 0.0
    %93 = vmatprep.subr.mxu0 0.0
    %94 = vmatpush1.xpose.msra.mxu0 0.0
    %95 = vmatprep.subr.mxu0 0.0
    %96 = vmatpush1.xpose.msra.mxu0 0.0
    %97 = vmatprep.subr.mxu0 0.0
    %98 = vmatpush1.xpose.msra.mxu0 0.0
    %99 = vmatprep.subr.mxu0 0.0
    %100 = vmatpush1.xpose.msra.mxu0 0.0
    %101 = vmatprep.subr.mxu0 0.0
    %102 = vmatpush1.xpose.msra.mxu0 0.0
    %103 = vmatprep.subr.mxu0 0.0
    %104 = vmatpush1.xpose.msra.mxu0 0.0
    %105 = vmatprep.subr.mxu0 0.0
    %106 = vmatpush1.xpose.msra.mxu0 0.0
    %107 = vmatprep.subr.mxu0 0.0
    %108 = vmatpush1.xpose.msra.mxu0 0.0
    %109 = vmatprep.subr.mxu0 0.0
    %110 = vmatpush1.xpose.msra.mxu0 %v44
    %111 = vmatprep.subr.mxu0 0.0
    %112 = vmatpush2.xpose.msra.mxu0 0.0
    %113 = vmatprep.subr.mxu0 0.0
    %114 = vmatpush2.xpose.msra.mxu0 0.0
    %115 = vmatprep.subr.mxu0 0.0
    %116 = vmatpush2.xpose.msra.mxu0 0.0
    %117 = vmatprep.subr.mxu0 0.0
    %118 = vmatpush2.xpose.msra.mxu0 0.0
    %119 = vmatprep.subr.mxu0 0.0
    %120 = vmatpush2.xpose.msra.mxu0 0.0
    %121 = vmatprep.subr.mxu0 0.0
    %122 = vmatpush2.xpose.msra.mxu0 0.0
    %123 = vmatprep.subr.mxu0 0.0
    %124 = vmatpush2.xpose.msra.mxu0 0.0
    %125 = vmatprep.subr.mxu0 0.0
    %126 = vmatpush2.xpose.msra.mxu0 0.0
    %127 = vmatprep.subr.mxu0 0.0
    %128 = vmatpush2.xpose.msra.mxu0 0.0
    %129 = vmatprep.subr.mxu0 0.0
    %130 = vmatpush2.xpose.msra.mxu0 0.0
    %131 = vmatprep.subr.mxu0 0.0
    %132 = vmatpush2.xpose.msra.mxu0 0.0
    %133 = vmatprep.subr.mxu0 0.0
    %134 = vmatpush2.xpose.msra.mxu0 0.0
    %135 = vmatprep.subr.mxu0 0.0
    %136 = vmatpush2.xpose.msra.mxu0 0.0
    %137 = vmatprep.subr.mxu0 0.0
    %138 = vmatpush2.xpose.msra.mxu0 0.0
    %139 = vmatprep.subr.mxu0 0.0
    %140 = vmatpush2.xpose.msra.mxu0 0.0
    %141 = vmatprep.subr.mxu0 0.0
    %142 = vmatpush2.xpose.msra.mxu0 0.0
    %143 = vmatprep.mubr.f32.mxu0 0.0
    %144 = vmatmul.mubr.f32.gmra.mxu0 %v78
    %v145 = vpop.f32.mrf.mxu0
    %v146 = vadd.f32 0.0, %v145
    %v147 = vpop.f32.mrf.mxu0
    %148 = vdwg.mxu0
    %149 = vmatprep.subr.mxu0 0.0
    %150 = vmatpush1.xpose.msra.mxu0 0.0
    %151 = vmatprep.subr.mxu0 0.0
    %152 = vmatpush1.xpose.msra.mxu0 0.0
    %153 = vmatprep.subr.mxu0 0.0
    %154 = vmatpush1.xpose.msra.mxu0 0.0
    %155 = vmatprep.subr.mxu0 0.0
    %156 = vmatpush1.xpose.msra.mxu0 0.0
    %157 = vmatprep.subr.mxu0 0.0
    %158 = vmatpush1.xpose.msra.mxu0 0.0
    %159 = vmatprep.subr.mxu0 0.0
    %160 = vmatpush1.xpose.msra.mxu0 0.0
    %161 = vmatprep.subr.mxu0 0.0
    %162 = vmatpush1.xpose.msra.mxu0 0.0
    %163 = vmatprep.subr.mxu0 0.0
    %164 = vmatpush1.xpose.msra.mxu0 0.0
    %165 = vmatprep.subr.mxu0 0.0
    %166 = vmatpush1.xpose.msra.mxu0 0.0
    %167 = vmatprep.subr.mxu0 0.0
    %168 = vmatpush1.xpose.msra.mxu0 0.0
    %169 = vmatprep.subr.mxu0 0.0
    %170 = vmatpush1.xpose.msra.mxu0 0.0
    %171 = vmatprep.subr.mxu0 0.0
    %172 = vmatpush1.xpose.msra.mxu0 0.0
    %173 = vmatprep.subr.mxu0 0.0
    %174 = vmatpush1.xpose.msra.mxu0 0.0
    %175 = vmatprep.subr.mxu0 0.0
    %176 = vmatpush1.xpose.msra.mxu0 0.0
    %177 = vmatprep.subr.mxu0 0.0
    %178 = vmatpush1.xpose.msra.mxu0 0.0
    %179 = vmatprep.subr.mxu0 0.0
    %180 = vmatpush1.xpose.msra.mxu0 %v52
    %181 = vmatprep.subr.mxu0 0.0
    %182 = vmatpush2.xpose.msra.mxu0 0.0
    %183 = vmatprep.subr.mxu0 0.0
    %184 = vmatpush2.xpose.msra.mxu0 0.0
    %185 = vmatprep.subr.mxu0 0.0
    %186 = vmatpush2.xpose.msra.mxu0 0.0
    %187 = vmatprep.subr.mxu0 0.0
    %188 = vmatpush2.xpose.msra.mxu0 0.0
    %189 = vmatprep.subr.mxu0 0.0
    %190 = vmatpush2.xpose.msra.mxu0 0.0
    %191 = vmatprep.subr.mxu0 0.0
    %192 = vmatpush2.xpose.msra.mxu0 0.0
    %193 = vmatprep.subr.mxu0 0.0
    %194 = vmatpush2.xpose.msra.mxu0 0.0
    %195 = vmatprep.subr.mxu0 0.0
    %196 = vmatpush2.xpose.msra.mxu0 0.0
    %197 = vmatprep.subr.mxu0 0.0
    %198 = vmatpush2.xpose.msra.mxu0 0.0
    %199 = vmatprep.subr.mxu0 0.0
    %200 = vmatpush2.xpose.msra.mxu0 0.0
    %201 = vmatprep.subr.mxu0 0.0
    %202 = vmatpush2.xpose.msra.mxu0 0.0
    %203 = vmatprep.subr.mxu0 0.0
    %204 = vmatpush2.xpose.msra.mxu0 0.0
    %205 = vmatprep.subr.mxu0 0.0
    %206 = vmatpush2.xpose.msra.mxu0 0.0
    %207 = vmatprep.subr.mxu0 0.0
    %208 = vmatpush2.xpose.msra.mxu0 0.0
    %209 = vmatprep.subr.mxu0 0.0
    %210 = vmatpush2.xpose.msra.mxu0 0.0
    %211 = vmatprep.subr.mxu0 0.0
    %212 = vmatpush2.xpose.msra.mxu0 0.0
    %213 = vmatprep.mubr.f32.mxu0 0.0
    %214 = vmatmul.mubr.f32.gmra.mxu0 %v78
    %v215 = vpop.f32.mrf.mxu0
    %v216 = vadd.f32 0.0, %v215
    %v217 = vpop.f32.mrf.mxu0
    %218 = vdwg.mxu0
    %v219 = vmul.f32 %v146, 2.0
    %v220 = vmul.f32 %v216, 2.0
    %v221 = vlaneseq
    %v222 = vshrl.u32 %v221, 7
    %v223 = vlaneseq
    %v224 = vand.u32 %v223, 127
    %vm225 = vcmp.lt.s32.totalorder %v222, 4
    %v226 = vstv %s53
    %v227 = vadd.s32 %v222, %v226
    %vm228 = vcmp.eq.s32.totalorder %v224, %v227
    %vm229 = vmand %vm225, %vm228
    %v230 = vsel %vm229, -inf, %v219
    %vm231 = vcmp.ge.s32.totalorder %v222, 4
    %v232 = vsub.s32 %v222, 4
    %v233 = vadd.s32 %v232, %v226
    %vm234 = vcmp.eq.s32.totalorder %v224, %v233
    %vm235 = vmand %vm231, %vm234
    %v236 = vsel %vm235, -inf, %v220
    %vm237 = vcmask 31744
    %v238 = vsel %vm237, %v230, -inf
    %239 = vmax.xlane.f32.xlu0 %v238
    %v240 = vpop.xlane.xlu0 %239
    %v241 = vsel %vm237, %v236, -inf
    %242 = vmax.xlane.f32.xlu0 %v241
    %v243 = vpop.xlane.xlu0 %242
    %v244 = vmax.f32 %v240, %v243
    %v245 = vsub.f32 %v230, %v244
    %v246 = vmul.f32 %v245, 1.442695
    %v247 = vpow.pop %v246
    %v248 = vsel %vm237, %v247, 0.0
    %249 = vadd.xlane.f32.xlu0 %v248
    %v250 = vpop.xlane.xlu0 %249
    %v251 = vsub.f32 %v236, %v244
    %v252 = vmul.f32 %v251, 1.442695
    %v253 = vpow.pop %v252
    %v254 = vsel %vm237, %v253, 0.0
    %255 = vadd.xlane.f32.xlu0 %v254
    %v256 = vpop.xlane.xlu0 %255
    %v257 = vadd.f32 %v250, %v256
    %v258 = vlog2.pop %v257
    %v259 = vmul.f32 %v258, 0.6931472
    %v260 = vadd.f32 %v244, %v259
    %vm261 = vcmask 7168
    %v262 = vsel %vm261, %v260, 0.0
    %263 = vadd.xlane.f32.xlu0 %v262
    %v264 = vpop.xlane.xlu0 %263
    %v265 = vrot.slane %v264, 4
    %v266 = vadd.f32 %v264, %v265
    %v267 = vrot.slane %v266, 2
    %v268 = vadd.f32 %v266, %v267
    %v269 = vrot.slane %v268, 1
    %v270 = vadd.f32 %v268, %v269
    %s271 = vtos %v270
    %v272 = vstv %s271
    %vm273 = vcmask 3072
    %v274 = vsel %vm273, %v75, 0.0
    %275 = vadd.xlane.f32.xlu0 %v274
    %v276 = vpop.xlane.xlu0 %275
    %v277 = vrot.slane %v276, 4
    %v278 = vadd.f32 %v276, %v277
    %v279 = vrot.slane %v278, 2
    %v280 = vadd.f32 %v278, %v279
    %v281 = vrot.slane %v280, 1
    %v282 = vadd.f32 %v280, %v281
    %s283 = vtos %v282
    %v284 = vstv %s283
    %v285 = vmul.f32 %v284, 4.0
    %v286 = vsub.f32 %v272, %v285
    %287 = vst [vmem:[#allocation8] sm:$0xff] %v286
    // Predicated region
    $region18: #{tpu_custom_call.1} parent=1 // pred_check
      _
    $region19: #{tpu_custom_call.1} parent=1 // pred_check_branch
      %289 = sbr.rel (0) target = $region21
    $region20: #{tpu_custom_call.1} parent=1 // pred_region
      %s291 = ssub.s32 128, 128
      %292 = vsyncadd [#allocation5], %s291
      %s294 = sshll.u32 [#allocation8], 4
      %s295 = int_to_ptr.vmem [resolvable:$true] %s294
      %297 = dma.vmem_to_hbm [thread:$0]  %s295, 128, %s2, [#allocation5]
    $region21: #{tpu_custom_call.1} parent=1 // pred_fallthru
      _
    // Predicated region
    $region22: #{tpu_custom_call.1} parent=1 // pred_check
      _
    $region23: #{tpu_custom_call.1} parent=1 // pred_check_branch
      %299 = sbr.rel (0) target = $region25
    $region24: #{tpu_custom_call.1} parent=1 // pred_region
      %300 = dma.done [#allocation5], 128
    $region25: #{tpu_custom_call.1} parent=1 // pred_fallthru
      _
    %301 = vsyncpa [#allocation4], 1
    %302 = vsyncpa [#allocation7], 1
    %303 = vsyncpa [#allocation5], 1

</llo_original>
